<compile_context>
chip_gen: v6e
topology: v6e:2x2x1
jax: 0.10.0
libtpu: 0.0.40
codegen_flags: <defaults>
</compile_context>

<pallas_src>
import functools
from enum import Enum

import jax
import jax.numpy as jnp
from jax.experimental import pallas as pl
from jax.experimental.pallas import tpu as pltpu


class SemiSymbolicLayerType(Enum):
    CONJUNCTION = "conjunction"
    DISJUNCTION = "disjunction"


def _round_up(n: int, m: int) -> int:
    return ((n + m - 1) // m) * m


def _min_grid_steps() -> int:
    """v7x has 2 TensorCores -> keep >= 2 grid steps so the 'parallel' grid
    axis can shard across them; single-TC v5e/v6e prefer the fewest steps."""
    try:
        kind = jax.devices()[0].device_kind.lower()
    except Exception:
        return 1
    return 2 if ("v7" in kind or "7x" in kind) else 1


def _pack_factor(in_features: int, out_features: int) -> int:
    """Number of logical rows fused into one lane-dense packed row.

    Packing G rows turns [B,P] x [P,O] (O,P << 128 lanes -> masked stores and
    8-16x lane padding of every VMEM tile) into [B/G, G*P] x [G*P, G*O] with a
    block-diagonal weight, making the output last dim >= 128 (lane dense)."""
    if out_features >= 128:
        return 1
    g = -(-128 // out_features)  # ceil(128 / O)
    # Keep the resident block-diagonal weight small (<= ~2 MiB).
    while g > 1 and (g * in_features) * (g * out_features) * 4 > (2 << 20):
        g -= 1
    return max(g, 1)


def _semi_symbolic_kernel(x_ref, w_ref, bias_ref, o_ref):
    """One batch tile.

    x_ref    : [TB, G*P]  packed input tile (pipelined over the batch grid)
    w_ref    : [G*P, G*O] block-diagonal weight (G copies of W.T), resident
    bias_ref : [1,   G*O] delta*bias tiled G times, resident
    o_ref    : [TB, G*O]  packed output tile (lane dense)
    """
    acc = jnp.dot(x_ref[...], w_ref[...], preferred_element_type=jnp.float32)
    o_ref[...] = (acc + bias_ref[...]).astype(o_ref.dtype)


def _semi_symbolic_forward_packed(
    x,
    w_packed,
    bias_packed,
    *,
    out_features: int,
    pack: int,
    min_grid_steps: int,
    vmem_budget_bytes: int,
):
    """x: [B, P].  w_packed: [pack*P, pack*O] block-diagonal.  bias: [1, pack*O]."""
    B, _ = x.shape
    Kp, Np = w_packed.shape
    G, O = pack, out_features

    # --- pack G consecutive rows into one lane-dense row (contiguous reshape) ---
    Bp = _round_up(B, G)
    if Bp != B:  # at most G-1 extra rows
        x = jnp.pad(x, ((0, Bp - B), (0, 0)))
    rows = Bp // G
    xp = x.reshape(rows, Kp)

    # --- batch tile from a VMEM budget (x tile + out tile, double buffered) ---
    itemsize = jnp.dtype(x.dtype).itemsize
    row_bytes = (Kp + Np) * itemsize
    tb = max(8, (vmem_budget_bytes // (2 * row_bytes)) // 8 * 8)
    if min_grid_steps > 1:  # keep >= min_grid_steps so both v7x TCs get work
        tb = min(tb, _round_up(pl.cdiv(rows, min_grid_steps), 8))
    tb = max(8, min(tb, _round_up(rows, 8)))
    grid = (pl.cdiv(rows, tb),)  # ragged last block handled by Pallas

    cost = pl.CostEstimate(
        flops=2 * rows * Kp * Np,
        transcendentals=0,
        bytes_accessed=(xp.size + w_packed.size + bias_packed.size + rows * Np)
        * itemsize,
    )

    out = pl.pallas_call(
        _semi_symbolic_kernel,
        out_shape=jax.ShapeDtypeStruct((rows, Np), x.dtype),
        grid_spec=pltpu.PrefetchScalarGridSpec(
            num_scalar_prefetch=0,
            grid=grid,
            in_specs=[
                pl.BlockSpec((tb, Kp), lambda i: (i, 0)),   # x: pipelined per tile
                pl.BlockSpec((Kp, Np), lambda i: (0, 0)),   # packed W: resident
                pl.BlockSpec((1, Np), lambda i: (0, 0)),    # delta*bias: resident
            ],
            out_specs=pl.BlockSpec((tb, Np), lambda i: (i, 0)),
        ),
        compiler_params=pltpu.CompilerParams(
            dimension_semantics=("parallel",),  # shards grid over TCs on v7x
        ),
        cost_estimate=cost,
    )(xp, w_packed, bias_packed)

    out = out.reshape(Bp, O)
    return out if Bp == B else out[:B]


class SemiSymbolicPallas:
    """Pallas TPU port of SemiSymbolic.forward.

    The weight-derived bias and the lane-dense block-diagonal weight are
    computed ONCE at construction (not per call), and the forward is jitted."""

    def __init__(
        self,
        weights,                      # [out_features, in_features], PyTorch layout
        layer_type: SemiSymbolicLayerType,
        delta: float,
        *,
        vmem_budget_bytes: int = 8 << 20,
    ):
        O, P = weights.shape
        self.layer_type = layer_type
        self.delta = float(delta)
        G = _pack_factor(P, O)

        w32 = weights.astype(jnp.float32)
        abs_w = jnp.abs(w32)
        bias = jnp.max(abs_w, axis=1) - jnp.sum(abs_w, axis=1)
        if layer_type == SemiSymbolicLayerType.DISJUNCTION:
            bias = -bias
        bias_scaled = (jnp.float32(self.delta) * bias).reshape(1, O)

        wt = w32.T  # [P, O]
        # Block-diagonal [G*P, G*O] with G copies of W.T on the diagonal.
        w_packed = jnp.kron(jnp.eye(G, dtype=w32.dtype), wt) if G > 1 else wt
        bias_packed = jnp.tile(bias_scaled, (1, G))

        self._w_packed = jax.device_put(w_packed.astype(weights.dtype))
        self._bias_packed = jax.device_put(bias_packed.astype(jnp.float32))
        self._fwd = jax.jit(
            functools.partial(
                _semi_symbolic_forward_packed,
                out_features=O,
                pack=G,
                min_grid_steps=_min_grid_steps(),
                vmem_budget_bytes=int(vmem_budget_bytes),
            )
        )

    def __call__(self, x):
        return self._fwd(x, self._w_packed, self._bias_packed)


def semi_symbolic_reference(x, weights, layer_type, delta):
    """Pure-JAX reference mirroring the PyTorch module's forward."""
    abs_w = jnp.abs(weights)
    max_abs = jnp.max(abs_w, axis=1)
    sum_abs = jnp.sum(abs_w, axis=1)
    if layer_type == SemiSymbolicLayerType.CONJUNCTION:
        bias = max_abs - sum_abs
    else:
        bias = sum_abs - max_abs
    return x @ weights.T + delta * bias


if __name__ == "__main__":
    # Shapes consistent with the module: batch=2, in_features=16, out_features=8.
    B, in_features, out_features = 2, 16, 8
    delta = 0.5

    key = jax.random.PRNGKey(0)
    kx, kw1, kw2, kx2 = jax.random.split(key, 4)

    x = jax.random.normal(kx, (B, in_features), dtype=jnp.float32)
    # nn.init.normal_(mean=0.0, std=0.1) (weight_init_type='normal').
    w_conj = 0.1 * jax.random.normal(kw1, (out_features, in_features), dtype=jnp.float32)
    w_disj = 0.1 * jax.random.normal(kw2, (out_features, in_features), dtype=jnp.float32)

    # CONJUNCTION layer (packed weight/bias cached at construction).
    conj = SemiSymbolicPallas(w_conj, SemiSymbolicLayerType.CONJUNCTION, delta)
    out_c = jax.block_until_ready(conj(x))
    ref_c = semi_symbolic_reference(x, w_conj, SemiSymbolicLayerType.CONJUNCTION, delta)
    assert out_c.shape == (B, out_features)
    assert jnp.allclose(out_c, ref_c, atol=1e-5, rtol=1e-5)

    # DISJUNCTION layer.
    disj = SemiSymbolicPallas(w_disj, SemiSymbolicLayerType.DISJUNCTION, delta)
    out_d = jax.block_until_ready(disj(x))
    ref_d = semi_symbolic_reference(x, w_disj, SemiSymbolicLayerType.DISJUNCTION, delta)
    assert jnp.allclose(out_d, ref_d, atol=1e-5, rtol=1e-5)

    # Larger batch that is NOT a multiple of the pack factor (exercises the
    # tiny row pad) and a shrunken VMEM budget to force a multi-step ragged
    # grid through the pipelined path.
    B2 = 4100
    x2 = jax.random.normal(kx2, (B2, in_features), dtype=jnp.float32)
    conj_small_tiles = SemiSymbolicPallas(
        w_conj, SemiSymbolicLayerType.CONJUNCTION, delta,
        vmem_budget_bytes=256 * 1024,
    )
    out2 = jax.block_until_ready(conj_small_tiles(x2))
    ref2 = semi_symbolic_reference(x2, w_conj, SemiSymbolicLayerType.CONJUNCTION, delta)
    assert out2.shape == (B2, out_features)
    assert jnp.allclose(out2, ref2, atol=1e-4, rtol=1e-4)

    print("KERNEL_OK")
</pallas_src>

<mosaic_0001>
module attributes {stable_mosaic.version = 11 : i64} {
  func.func @_semi_symbolic_kernel(%arg0: i32, %arg1: memref<8x256xf32, #tpu.memory_space<vmem>>, %arg2: memref<256x128xf32, #tpu.memory_space<vmem>>, %arg3: memref<1x128xf32, #tpu.memory_space<vmem>>, %arg4: memref<8x128xf32, #tpu.memory_space<vmem>>) attributes {dimension_semantics = [#tpu.dimension_semantics<parallel>], iteration_bounds = array<i64: 1>, scalar_prefetch = 0 : i64, scratch_operands = 0 : i64, tpu.core_type = #tpu.core_type<tc>, window_params = [{transform_indices = @transform_0, window_bounds = array<i64: 8, 256>}, {pipeline_mode = #tpu.pipeline_mode<synchronous>, transform_indices = @transform_1, window_bounds = array<i64: 256, 128>}, {pipeline_mode = #tpu.pipeline_mode<synchronous>, transform_indices = @transform_2, window_bounds = array<i64: 1, 128>}, {transform_indices = @transform_3, window_bounds = array<i64: 8, 128>}]} {
    %c0 = arith.constant 0 : index
    %c0_0 = arith.constant 0 : index
    %0 = vector.load %arg1[%c0, %c0_0] : memref<8x256xf32, #tpu.memory_space<vmem>>, vector<8x256xf32>
    %c0_1 = arith.constant 0 : index
    %c0_2 = arith.constant 0 : index
    %1 = vector.load %arg2[%c0_1, %c0_2] : memref<256x128xf32, #tpu.memory_space<vmem>>, vector<256x128xf32>
    %cst = arith.constant dense<0.000000e+00> : vector<8x128xf32>
    %2 = tpu.matmul %0, %1, %cst {dimension_numbers = #tpu.dot_dimension_numbers<[1], [0], [0], [1], [0, 0, 1, 1], [], []>} : vector<8x256xf32>, vector<256x128xf32>, vector<8x128xf32> -> vector<8x128xf32>
    %c0_3 = arith.constant 0 : index
    %c0_4 = arith.constant 0 : index
    %3 = vector.load %arg3[%c0_3, %c0_4] : memref<1x128xf32, #tpu.memory_space<vmem>>, vector<1x128xf32>
    %4 = vector.broadcast %3 : vector<1x128xf32> to vector<8x128xf32>
    %5 = arith.addf %2, %4 : vector<8x128xf32>
    %c0_5 = arith.constant 0 : index
    %c0_6 = arith.constant 0 : index
    %6 = vector.load %arg4[%c0_5, %c0_6] : memref<8x128xf32, #tpu.memory_space<vmem>>, vector<8x128xf32>
    tpu.vector_store %arg4[%c0_5, %c0_6], %5 {strides = array<i32>} : memref<8x128xf32, #tpu.memory_space<vmem>>, vector<8x128xf32>,
    return
  }
  func.func @transform_0(%arg0: i32) -> (i32, i32) {
    %c0_i32 = arith.constant 0 : i32
    %c0_i32_0 = arith.constant 0 : i32
    return %arg0, %c0_i32 : i32, i32
  }
  func.func @transform_1(%arg0: i32) -> (i32, i32) {
    %c0_i32 = arith.constant 0 : i32
    %c0_i32_0 = arith.constant 0 : i32
    %c0_i32_1 = arith.constant 0 : i32
    return %c0_i32, %c0_i32_0 : i32, i32
  }
  func.func @transform_2(%arg0: i32) -> (i32, i32) {
    %c0_i32 = arith.constant 0 : i32
    %c0_i32_0 = arith.constant 0 : i32
    %c0_i32_1 = arith.constant 0 : i32
    return %c0_i32, %c0_i32_0 : i32, i32
  }
  func.func @transform_3(%arg0: i32) -> (i32, i32) {
    %c0_i32 = arith.constant 0 : i32
    %c0_i32_0 = arith.constant 0 : i32
    return %arg0, %c0_i32 : i32, i32
  }
}

</mosaic_0001>

<llo_original>
// kernel: _semi_symbolic_forward_packed.1
$region0: #{_semi_symbolic_forward_packed.1}
  #allocation0 [shape = 'u32[]', space=smem, size = 0x4, offset = 0x4, fixed_abs, tag = 'smem constant byte address 0x4 - core index']
  #allocation1 [shape = 'u32[144,128]{1,0:T(1,128)}', space=vmem, size = 0x12000, scoped, tag = 'internal scratch']
  %s0 = inlined_call_operand.vmem [shape: f32[1,256], index: 0, kind: input, shape index: {}]
  %s1 = inlined_call_operand.hbm [shape: f32[256,128], index: 1, kind: input, shape index: {}]
  %s2 = inlined_call_operand.vmem [shape: f32[1,128], index: 2, kind: input, shape index: {}]
  %s3 = inlined_call_operand.vmem [shape: f32[1,128], index: 3, kind: output, shape index: {}]
  %s4 = sld [smem:[#allocation0]]
  $region56: #{_semi_symbolic_forward_packed.1} parent=0
    _
  %s6 = ssub.s32 1, %s4
  %s7 = scalar_select 0, %s6, %s4
  $region1: #{_semi_symbolic_forward_packed.1} parent=0
    #allocation2 [shape = 'u8[131072]{0}', space=vmem, size = 0x20000, scoped, tag = 'input window, operand 1, single buffered']
    #allocation3 [shape = 's32[1]{0}', space=sflag, size = 0x4, scoped, tag = 'scoped memory for _semi_symbolic_forward_packed.1']
    #allocation4 [shape = 'u8[4096]{0}', space=vmem, size = 0x1000, scoped, tag = 'output window, operand 0, single buffered']
    %8 = vsyncpa [#allocation3], 0
    // Predicated region
    $region2: #{_semi_symbolic_forward_packed.1} parent=1 // pred_check
      _
    $region3: #{_semi_symbolic_forward_packed.1} parent=1 // pred_check_branch
      %10 = sbr.rel (0) target = $region5
    $region4: #{_semi_symbolic_forward_packed.1} parent=1 // pred_region
      _
    $region5: #{_semi_symbolic_forward_packed.1} parent=1 // pred_fallthru
      _
    // Predicated region
    $region6: #{_semi_symbolic_forward_packed.1} parent=1 // pred_check
      _
    $region7: #{_semi_symbolic_forward_packed.1} parent=1 // pred_check_branch
      %12 = sbr.rel (0) target = $region9
    $region8: #{_semi_symbolic_forward_packed.1} parent=1 // pred_region
      %s14 = ssub.s32 4096, 4096
      %15 = vsyncadd [#allocation3], %s14
      %s16 = sshll.u32 [#allocation2], 4
      %s17 = int_to_ptr.vmem [resolvable:$true] %s16
      %22 = dma.hbm_to_vmem [thread:$0]  %s1, 4096, %s17, [#allocation3], 128, 128, 8
    $region9: #{_semi_symbolic_forward_packed.1} parent=1 // pred_fallthru
      _
    // Predicated region
    $region10: #{_semi_symbolic_forward_packed.1} parent=1 // pred_check
      _
    $region11: #{_semi_symbolic_forward_packed.1} parent=1 // pred_check_branch
      %24 = sbr.rel (0) target = $region13
    $region12: #{_semi_symbolic_forward_packed.1} parent=1 // pred_region
      _
    $region13: #{_semi_symbolic_forward_packed.1} parent=1 // pred_fallthru
      _
    // Predicated region
    $region14: #{_semi_symbolic_forward_packed.1} parent=1 // pred_check
      _
    $region15: #{_semi_symbolic_forward_packed.1} parent=1 // pred_check_branch
      %26 = sbr.rel (0) target = $region17
    $region16: #{_semi_symbolic_forward_packed.1} parent=1 // pred_region
      %27 = dma.done [#allocation3], 4096
    $region17: #{_semi_symbolic_forward_packed.1} parent=1 // pred_fallthru
      _
    %v28 = vld [vmem:[%s0] sm:$0x3]
    %v29 = vld [vmem:[%s0 + $0x2] sm:$0x3]
    %v30 = vld [vmem:[%s0 + $0x4] sm:$0x3]
    %v31 = vld [vmem:[%s0 + $0x6] sm:$0x3]
    %v32 = vld [vmem:[%s0 + $0x8] sm:$0x3]
    %v33 = vld [vmem:[%s0 + $0xa] sm:$0x3]
    %v34 = vld [vmem:[%s0 + $0xc] sm:$0x3]
    %v35 = vld [vmem:[%s0 + $0xe] sm:$0x3]
    %v36 = vld [vmem:[#allocation2] sm:$0xff]
    %v37 = vld [vmem:[#allocation2 + $0x8] sm:$0xff]
    %v38 = vld [vmem:[#allocation2 + $0x10] sm:$0xff]
    %v39 = vld [vmem:[#allocation2 + $0x18] sm:$0xff]
    %v40 = vld [vmem:[#allocation2 + $0x20] sm:$0xff]
    %v41 = vld [vmem:[#allocation2 + $0x28] sm:$0xff]
    %v42 = vld [vmem:[#allocation2 + $0x30] sm:$0xff]
    %v43 = vld [vmem:[#allocation2 + $0x38] sm:$0xff]
    %v44 = vld [vmem:[#allocation2 + $0x40] sm:$0xff]
    %v45 = vld [vmem:[#allocation2 + $0x48] sm:$0xff]
    %v46 = vld [vmem:[#allocation2 + $0x50] sm:$0xff]
    %v47 = vld [vmem:[#allocation2 + $0x58] sm:$0xff]
    %v48 = vld [vmem:[#allocation2 + $0x60] sm:$0xff]
    %v49 = vld [vmem:[#allocation2 + $0x68] sm:$0xff]
    %v50 = vld [vmem:[#allocation2 + $0x70] sm:$0xff]
    %v51 = vld [vmem:[#allocation2 + $0x78] sm:$0xff]
    %v52 = vld [vmem:[#allocation2 + $0x80] sm:$0xff]
    %v53 = vld [vmem:[#allocation2 + $0x88] sm:$0xff]
    %v54 = vld [vmem:[#allocation2 + $0x90] sm:$0xff]
    %v55 = vld [vmem:[#allocation2 + $0x98] sm:$0xff]
    %v56 = vld [vmem:[#allocation2 + $0xa0] sm:$0xff]
    %v57 = vld [vmem:[#allocation2 + $0xa8] sm:$0xff]
    %v58 = vld [vmem:[#allocation2 + $0xb0] sm:$0xff]
    %v59 = vld [vmem:[#allocation2 + $0xb8] sm:$0xff]
    %v60 = vld [vmem:[#allocation2 + $0xc0] sm:$0xff]
    %v61 = vld [vmem:[#allocation2 + $0xc8] sm:$0xff]
    %v62 = vld [vmem:[#allocation2 + $0xd0] sm:$0xff]
    %v63 = vld [vmem:[#allocation2 + $0xd8] sm:$0xff]
    %v64 = vld [vmem:[#allocation2 + $0xe0] sm:$0xff]
    %v65 = vld [vmem:[#allocation2 + $0xe8] sm:$0xff]
    %v66 = vld [vmem:[#allocation2 + $0xf0] sm:$0xff]
    %v67 = vld [vmem:[#allocation2 + $0xf8] sm:$0xff]
    %v68 = vld [vmem:[%s2] sm:$0x1]
    %v70 = vlaneseq
    %v71 = vshrl.u32 %v70, 7
    %v72 = vsub.s32 0, %v71
    %v73 = vrot.slane %v68, %v72
    %v83 = vcombine.low %v28, %v29
    %v84 = vcombine.low %v30, %v31
    %v85 = vcombine.low %v32, %v33
    %v86 = vcombine.low %v34, %v35
    %v88 = vunpack.c.l.s4 1966171168
    %v89 = vunpack.c.0.s8 %v88
    %v90 = vlaneseq
    %v91 = vshrl.u32 %v90, 7
    %v92 = vsub.s32 %v89, %v91
    %v93 = vrot.slane %v83, %v92
    %v95 = vunpack.c.l.s4 1966171168
    %v96 = vunpack.c.0.s8 %v95
    %v97 = vlaneseq
    %v98 = vshrl.u32 %v97, 7
    %v99 = vsub.s32 %v96, %v98
    %v100 = vrot.slane %v84, %v99
    %v102 = vunpack.c.l.s4 1966171168
    %v103 = vunpack.c.0.s8 %v102
    %v104 = vlaneseq
    %v105 = vshrl.u32 %v104, 7
    %v106 = vsub.s32 %v103, %v105
    %v107 = vrot.slane %v85, %v106
    %v109 = vunpack.c.l.s4 1966171168
    %v110 = vunpack.c.0.s8 %v109
    %v111 = vlaneseq
    %v112 = vshrl.u32 %v111, 7
    %v113 = vsub.s32 %v110, %v112
    %v114 = vrot.slane %v86, %v113
    %v115 = vcombine.low %v93, %v100
    %v116 = vcombine.high %v93, %v100
    %v117 = vcombine.low %v107, %v114
    %v118 = vcombine.high %v107, %v114
    %v120 = vunpack.c.l.s4 1966171168
    %v121 = vunpack.c.0.s8 %v120
    %v122 = vlaneseq
    %v123 = vshrl.u32 %v122, 7
    %v124 = vsub.s32 %v121, %v123
    %v125 = vrot.slane %v115, %v124
    %v127 = vunpack.c.l.s4 1966171168
    %v128 = vunpack.c.0.s8 %v127
    %v129 = vlaneseq
    %v130 = vshrl.u32 %v129, 7
    %v131 = vsub.s32 %v128, %v130
    %v132 = vrot.slane %v116, %v131
    %v134 = vunpack.c.l.s4 1966171168
    %v135 = vunpack.c.0.s8 %v134
    %v136 = vlaneseq
    %v137 = vshrl.u32 %v136, 7
    %v138 = vsub.s32 %v135, %v137
    %v139 = vrot.slane %v117, %v138
    %v141 = vunpack.c.l.s4 1966171168
    %v142 = vunpack.c.0.s8 %v141
    %v143 = vlaneseq
    %v144 = vshrl.u32 %v143, 7
    %v145 = vsub.s32 %v142, %v144
    %v146 = vrot.slane %v118, %v145
    %v147 = vcombine.low %v125, %v139
    %v148 = vcombine.low %v132, %v146
    %151 = vmatprep.subr.mxu0 0.0
    %152 = vmatpush1.msra.mxu0 %v51
    %153 = vmatprep.subr.mxu0 0.0
    %154 = vmatpush1.msra.mxu0 %v50
    %155 = vmatprep.subr.mxu0 0.0
    %156 = vmatpush1.msra.mxu0 %v49
    %157 = vmatprep.subr.mxu0 0.0
    %158 = vmatpush1.msra.mxu0 %v48
    %159 = vmatprep.subr.mxu0 0.0
    %160 = vmatpush1.msra.mxu0 %v47
    %161 = vmatprep.subr.mxu0 0.0
    %162 = vmatpush1.msra.mxu0 %v46
    %163 = vmatprep.subr.mxu0 0.0
    %164 = vmatpush1.msra.mxu0 %v45
    %165 = vmatprep.subr.mxu0 0.0
    %166 = vmatpush1.msra.mxu0 %v44
    %167 = vmatprep.subr.mxu0 0.0
    %168 = vmatpush1.msra.mxu0 %v43
    %169 = vmatprep.subr.mxu0 0.0
    %170 = vmatpush1.msra.mxu0 %v42
    %171 = vmatprep.subr.mxu0 0.0
    %172 = vmatpush1.msra.mxu0 %v41
    %173 = vmatprep.subr.mxu0 0.0
    %174 = vmatpush1.msra.mxu0 %v40
    %175 = vmatprep.subr.mxu0 0.0
    %176 = vmatpush1.msra.mxu0 %v39
    %177 = vmatprep.subr.mxu0 0.0
    %178 = vmatpush1.msra.mxu0 %v38
    %179 = vmatprep.subr.mxu0 0.0
    %180 = vmatpush1.msra.mxu0 %v37
    %181 = vmatprep.subr.mxu0 0.0
    %182 = vmatpush1.msra.mxu0 %v36
    %183 = vmatprep.subr.mxu0 0.0
    %184 = vmatpush2.msra.mxu0 %v67
    %185 = vmatprep.subr.mxu0 0.0
    %186 = vmatpush2.msra.mxu0 %v66
    %187 = vmatprep.subr.mxu0 0.0
    %188 = vmatpush2.msra.mxu0 %v65
    %189 = vmatprep.subr.mxu0 0.0
    %190 = vmatpush2.msra.mxu0 %v64
    %191 = vmatprep.subr.mxu0 0.0
    %192 = vmatpush2.msra.mxu0 %v63
    %193 = vmatprep.subr.mxu0 0.0
    %194 = vmatpush2.msra.mxu0 %v62
    %195 = vmatprep.subr.mxu0 0.0
    %196 = vmatpush2.msra.mxu0 %v61
    %197 = vmatprep.subr.mxu0 0.0
    %198 = vmatpush2.msra.mxu0 %v60
    %199 = vmatprep.subr.mxu0 0.0
    %200 = vmatpush2.msra.mxu0 %v59
    %201 = vmatprep.subr.mxu0 0.0
    %202 = vmatpush2.msra.mxu0 %v58
    %203 = vmatprep.subr.mxu0 0.0
    %204 = vmatpush2.msra.mxu0 %v57
    %205 = vmatprep.subr.mxu0 0.0
    %206 = vmatpush2.msra.mxu0 %v56
    %207 = vmatprep.subr.mxu0 0.0
    %208 = vmatpush2.msra.mxu0 %v55
    %209 = vmatprep.subr.mxu0 0.0
    %210 = vmatpush2.msra.mxu0 %v54
    %211 = vmatprep.subr.mxu0 0.0
    %212 = vmatpush2.msra.mxu0 %v53
    %213 = vmatprep.subr.mxu0 0.0
    %214 = vmatpush2.msra.mxu0 %v52
    %215 = vmatprep.mubr.f32.mxu0 %v148
    %216 = vmatmul.mubr.f32.gmra.mxu0 %v147
    %v217 = vpop.f32.mrf.mxu0
    %v218 = vadd.f32 %v73, %v217
    %v219 = vpop.f32.mrf.mxu0
    %220 = vdwg.mxu0
    %221 = vst [vmem:[#allocation4] sm:$0xff] %v218
    // Predicated region
    $region18: #{_semi_symbolic_forward_packed.1} parent=1 // pred_check
      _
    $region19: #{_semi_symbolic_forward_packed.1} parent=1 // pred_check_branch
      %223 = sbr.rel (0) target = $region21
    $region20: #{_semi_symbolic_forward_packed.1} parent=1 // pred_region
      // Predicated region
      $region22: #{_semi_symbolic_forward_packed.1} parent=20 // pred_check
        _
      $region23: #{_semi_symbolic_forward_packed.1} parent=20 // pred_check_branch
        %225 = sbr.rel (0) target = $region25
      $region24: #{_semi_symbolic_forward_packed.1} parent=20 // pred_region
        // Predicated region
        $region26: #{_semi_symbolic_forward_packed.1} parent=24 // pred_check
          _
        $region27: #{_semi_symbolic_forward_packed.1} parent=24 // pred_check_branch
          %227 = sbr.rel target = $region29
        $region28: #{_semi_symbolic_forward_packed.1} parent=24 // pred_region
          // Predicated region
          $region41: #{_semi_symbolic_forward_packed.1} parent=28 // pred_check
            _
          $region42: #{_semi_symbolic_forward_packed.1} parent=28 // pred_check_branch
            %243 = sbr.rel (0) target = $region44
          $region43: #{_semi_symbolic_forward_packed.1} parent=28 // pred_region
            %s245 = ssub.s32 2, 1
            loop: start=0, step=1, limit=1
            $region45: #{_semi_symbolic_forward_packed.1} parent=43 // loop_pre_header
              _
            $region46: #{_semi_symbolic_forward_packed.1} parent=43 // loop_header
              %s247 = sphi 0, %s251
              %p248 = scmp.ge.s32.totalorder %s247, 1
              %s252 = sphi [#allocation4], [#allocation4]
              %s253 = sphi %s3, %s3
            $region47: #{_semi_symbolic_forward_packed.1} parent=43 // loop_header_branch
              %250 = sbr.rel (%p248) target = $region51
            $region48: #{_semi_symbolic_forward_packed.1} parent=43 // loop_body
              %v254 = vld [vmem:[%s252] sm:%s245]
              %255 = vst [vmem:[%s253] sm:%s245] %v254
            $region49: #{_semi_symbolic_forward_packed.1} parent=43 // loop_footer
              %s251 = sadd.s32 1, %s247
            $region50: #{_semi_symbolic_forward_packed.1} parent=43 // loop_footer_branch
              %246 = sbr.rel target = $region46
            $region51: #{_semi_symbolic_forward_packed.1} parent=43 // loop_exit
              _
          $region44: #{_semi_symbolic_forward_packed.1} parent=28 // pred_fallthru
            _
        $region29: #{_semi_symbolic_forward_packed.1} parent=24 // pred_fallthru
          _
        // Predicated region
        $region30: #{_semi_symbolic_forward_packed.1} parent=24 // pred_check
          _
        $region31: #{_semi_symbolic_forward_packed.1} parent=24 // pred_check_branch
          %229 = sbr.rel (0) target = $region33
        $region32: #{_semi_symbolic_forward_packed.1} parent=24 // pred_region
          %s231 = ssub.s32 2, 1
          loop: start=0, step=1, limit=1
          $region34: #{_semi_symbolic_forward_packed.1} parent=32 // loop_pre_header
            _
          $region35: #{_semi_symbolic_forward_packed.1} parent=32 // loop_header
            %s233 = sphi 0, %s237
            %p234 = scmp.ge.s32.totalorder %s233, 1
            %s238 = sphi [#allocation4], [#allocation4]
            %s239 = sphi %s3, %s3
          $region36: #{_semi_symbolic_forward_packed.1} parent=32 // loop_header_branch
            %236 = sbr.rel (%p234) target = $region40
          $region37: #{_semi_symbolic_forward_packed.1} parent=32 // loop_body
            %v240 = vld [vmem:[%s238] sm:%s231]
            %241 = vst [vmem:[%s239] sm:%s231] %v240
          $region38: #{_semi_symbolic_forward_packed.1} parent=32 // loop_footer
            %s237 = sadd.s32 1, %s233
          $region39: #{_semi_symbolic_forward_packed.1} parent=32 // loop_footer_branch
            %232 = sbr.rel target = $region35
          $region40: #{_semi_symbolic_forward_packed.1} parent=32 // loop_exit
            _
        $region33: #{_semi_symbolic_forward_packed.1} parent=24 // pred_fallthru
          _
      $region25: #{_semi_symbolic_forward_packed.1} parent=20 // pred_fallthru
        _
      %256 = vnop
    $region21: #{_semi_symbolic_forward_packed.1} parent=1 // pred_fallthru
      _
    // Predicated region
    $region52: #{_semi_symbolic_forward_packed.1} parent=1 // pred_check
      _
    $region53: #{_semi_symbolic_forward_packed.1} parent=1 // pred_check_branch
      %258 = sbr.rel (0) target = $region55
    $region54: #{_semi_symbolic_forward_packed.1} parent=1 // pred_region
      _
    $region55: #{_semi_symbolic_forward_packed.1} parent=1 // pred_fallthru
      _
    %259 = vsyncpa [#allocation3], 1

</llo_original>
